<compile_context>
chip_gen: v5e
topology: v5e:2x2
jax: 0.10.0
libtpu: 0.0.40
codegen_flags: <defaults>
</compile_context>

<pallas_src>
import functools

import jax
import jax.numpy as jnp
from jax.experimental import pallas as pl
from jax.experimental.pallas import tpu as pltpu


# --------------------------- per-generation tuning ---------------------------

@functools.lru_cache(maxsize=None)
def _chip_config():
    """Query the TPU generation once and pick tuning knobs accordingly."""
    vmem_cap_bytes = None
    num_cores = None
    try:
        info = pltpu.get_tpu_info()
        for name in ("vmem_capacity_bytes", "vmem_size_bytes", "vmem_bytes"):
            v = getattr(info, name, None)
            if v:
                vmem_cap_bytes = int(v)
                break
        for name in ("num_cores", "core_count", "num_tensorcores"):
            v = getattr(info, name, None)
            if v:
                num_cores = int(v)
                break
    except Exception:
        pass

    if vmem_cap_bytes is None:
        vmem_cap_bytes = 64 << 20          # conservative: assume 64 MiB part

    big_vmem = vmem_cap_bytes >= (96 << 20)   # v5e / v6e class (128 MiB, 1 TC)
    if num_cores is None:
        num_cores = 1 if big_vmem else 2      # v7x-class chips have 2 TCs

    num_splits = max(1, min(int(num_cores), 2))
    if big_vmem:
        return dict(num_splits=num_splits,
                    vmem_limit=64 << 20, vmem_cap=100 << 20,
                    pass1_budget=24 << 20, pass2_budget=20 << 20,
                    row_cap=4096,
                    fuse_bytes=12 << 20, fused_vmem=100 << 20)
    return dict(num_splits=num_splits,
                vmem_limit=32 << 20, vmem_cap=48 << 20,
                pass1_budget=12 << 20, pass2_budget=8 << 20,
                row_cap=8192,
                fuse_bytes=6 << 20, fused_vmem=48 << 20)


def _pick_tile_rows(n_rows, per_row_bytes, budget, row_cap):
    """Largest sublane-aligned row tile whose VMEM footprint fits `budget`."""
    tile = int(budget // max(per_row_bytes, 1))
    tile = max(8, (tile // 8) * 8)
    tile = min(tile, row_cap)
    if tile >= n_rows:
        tile = int(n_rows)          # full-extent block is always a legal shape
    return tile


def _vmem_limit_bytes(cfg, block_bytes):
    # block_bytes already includes double-buffering + f32 temps; add slack.
    need = int(block_bytes) + (2 << 20)
    return int(min(cfg["vmem_cap"], max(cfg["vmem_limit"], need)))


# --------------------------- fused single-block path -------------------------

def _fused_kernel(x_ref, g_ref, b_ref, o_ref, *, eps):
    x = x_ref[...].astype(jnp.float32)
    mean = jnp.mean(x, axis=0, keepdims=True)
    xc = x - mean
    var = jnp.mean(xc * xc, axis=0, keepdims=True)   # biased, two-pass (stable)
    rstd = jax.lax.rsqrt(var + eps)
    o_ref[...] = (xc * (rstd * g_ref[...]) + b_ref[...]).astype(o_ref.dtype)


def _fused_call(x2, g32, b32, *, eps, vmem_limit, single_buffer):
    n, d = x2.shape
    xo_kw = dict(pipeline_mode=pl.Buffered(1)) if single_buffer else {}
    return pl.pallas_call(
        functools.partial(_fused_kernel, eps=eps),
        out_shape=jax.ShapeDtypeStruct((n, d), x2.dtype),
        grid_spec=pltpu.PrefetchScalarGridSpec(
            num_scalar_prefetch=0,
            grid=(1,),
            in_specs=[
                pl.BlockSpec((n, d), lambda i: (0, 0), **xo_kw),
                pl.BlockSpec((1, d), lambda i: (0, 0)),
                pl.BlockSpec((1, d), lambda i: (0, 0)),
            ],
            out_specs=pl.BlockSpec((n, d), lambda i: (0, 0), **xo_kw),
        ),
        compiler_params=pltpu.CompilerParams(
            dimension_semantics=("arbitrary",),
            vmem_limit_bytes=vmem_limit,
        ),
    )(x2, g32, b32)


# --------------------------- pass 1: per-feature sums ------------------------

def _stats_kernel(x_ref, sum_ref, sumsq_ref, *, tile_rows, tiles_per_split,
                  n_valid_rows, need_mask):
    i = pl.program_id(1)

    @pl.when(i == 0)
    def _():
        sum_ref[...] = jnp.zeros_like(sum_ref)
        sumsq_ref[...] = jnp.zeros_like(sumsq_ref)

    x = x_ref[...].astype(jnp.float32)

    if not need_mask:
        sum_ref[...] += jnp.sum(x, axis=0, keepdims=True)[None]
        sumsq_ref[...] += jnp.sum(x * x, axis=0, keepdims=True)[None]
    else:
        # Only boundary tiles (ragged last tile / clamped duplicates from the
        # split) pay for the iota/compare/select; bulk tiles are mask-free.
        c = pl.program_id(0)
        row0 = (c * tiles_per_split + i) * tile_rows

        @pl.when(row0 + tile_rows <= n_valid_rows)
        def _():
            sum_ref[...] += jnp.sum(x, axis=0, keepdims=True)[None]
            sumsq_ref[...] += jnp.sum(x * x, axis=0, keepdims=True)[None]

        @pl.when(row0 + tile_rows > n_valid_rows)
        def _():
            rows = jax.lax.broadcasted_iota(jnp.int32, x.shape, 0) + row0
            xm = jnp.where(rows < n_valid_rows, x, 0.0)
            sum_ref[...] += jnp.sum(xm, axis=0, keepdims=True)[None]
            sumsq_ref[...] += jnp.sum(xm * xm, axis=0, keepdims=True)[None]


def _compute_stats(xf, tile_rows, num_splits, vmem_limit):
    nf, df = xf.shape
    n_tiles = pl.cdiv(nf, tile_rows)
    num_splits = int(min(num_splits, n_tiles))
    tiles_per_split = pl.cdiv(n_tiles, num_splits)
    need_mask = (nf % tile_rows != 0) or (n_tiles % num_splits != 0)

    def x_map(c, i):
        # Clamp out-of-range tiles (odd tile count split 2 ways) to the last
        # valid tile; the kernel's masked branch zeroes their contribution.
        return (jnp.minimum(c * tiles_per_split + i, n_tiles - 1), 0)

    kernel = functools.partial(
        _stats_kernel, tile_rows=tile_rows, tiles_per_split=tiles_per_split,
        n_valid_rows=nf, need_mask=need_mask)

    return pl.pallas_call(
        kernel,
        out_shape=(
            jax.ShapeDtypeStruct((num_splits, 1, df), jnp.float32),
            jax.ShapeDtypeStruct((num_splits, 1, df), jnp.float32),
        ),
        grid_spec=pltpu.PrefetchScalarGridSpec(
            num_scalar_prefetch=0,
            grid=(num_splits, tiles_per_split),
            in_specs=[pl.BlockSpec((tile_rows, df), x_map)],
            out_specs=(
                pl.BlockSpec((1, 1, df), lambda c, i: (c, 0, 0)),
                pl.BlockSpec((1, 1, df), lambda c, i: (c, 0, 0)),
            ),
        ),
        compiler_params=pltpu.CompilerParams(
            dimension_semantics=("parallel", "arbitrary"),
            vmem_limit_bytes=vmem_limit,
        ),
    )(xf)


# --------------------------- pass 2: y = x*scale + bias ----------------------

def _apply_kernel(scale_ref, bias_ref, x_ref, o_ref):
    o_ref[...] = (x_ref[...].astype(jnp.float32) * scale_ref[...]
                  + bias_ref[...]).astype(o_ref.dtype)


def _apply_affine(xf, scale_f, bias_f, tile_rows, vmem_limit):
    nf, df = xf.shape
    n_tiles = pl.cdiv(nf, tile_rows)
    return pl.pallas_call(
        _apply_kernel,
        out_shape=jax.ShapeDtypeStruct((nf, df), xf.dtype),
        grid_spec=pltpu.PrefetchScalarGridSpec(
            num_scalar_prefetch=0,
            grid=(n_tiles,),
            in_specs=[
                pl.BlockSpec((1, df), lambda i: (0, 0)),
                pl.BlockSpec((1, df), lambda i: (0, 0)),
                pl.BlockSpec((tile_rows, df), lambda i: (i, 0)),
            ],
            out_specs=pl.BlockSpec((tile_rows, df), lambda i: (i, 0)),
        ),
        compiler_params=pltpu.CompilerParams(
            dimension_semantics=("parallel",),
            vmem_limit_bytes=vmem_limit,
        ),
    )(scale_f, bias_f, xf)


# --------------------------- wrapper ------------------------------------------

def batchnorm_forward(x, gamma, beta, *, eps=1e-5, fuse_bytes_limit=None):
    """BatchNorm over the last axis using batch statistics (training mode)."""
    orig_shape = x.shape
    assert x.ndim >= 2, "BatchNorm module requires x.dim() >= 2"
    D = int(orig_shape[-1])
    N = 1
    for s in orig_shape[:-1]:
        N *= int(s)

    cfg = _chip_config()
    if fuse_bytes_limit is None:
        fuse_bytes_limit = cfg["fuse_bytes"]

    x2 = x.reshape(N, D)                               # metadata-only reshape
    g32 = gamma.reshape(1, D).astype(jnp.float32)
    b32 = beta.reshape(1, D).astype(jnp.float32)

    # --- small/medium inputs: one block, fused stats + normalize (one HBM read
    # of x instead of two). Buffered(1) halves the path's VMEM footprint since
    # grid=(1,) never pipelines; fall back to default buffering if rejected.
    if N * D * 4 <= fuse_bytes_limit:
        try:
            out = _fused_call(x2, g32, b32, eps=eps,
                              vmem_limit=cfg["fused_vmem"], single_buffer=True)
            out = jax.block_until_ready(out)
        except Exception:
            out = _fused_call(x2, g32, b32, eps=eps,
                              vmem_limit=cfg["fused_vmem"], single_buffer=False)
        return out.reshape(orig_shape)

    # --- lane-dense folding: pack up to 128/D rows into one wider row. Largest
    # power-of-two fold dividing N is used, so ragged N still gets (mostly)
    # lane-dense blocks instead of falling back to D-wide masked stores.
    # TODO(synk): fully general ragged-N folding (fold the bulk + micro-kernel
    # for the <128/D leftover rows) needs an in-place output stitch; skipped.
    fold = 1
    if D < 128 and 128 % D == 0:
        fold = 128 // D
        while fold > 1 and N % fold != 0:
            fold //= 2
    Nf, Df = N // fold, D * fold
    xf = x2.reshape(Nf, Df)                            # metadata-only reshape

    itemsize = x.dtype.itemsize
    # Per-row VMEM footprint incl. double-buffering and in-kernel f32 temps.
    per_row1 = Df * (2 * itemsize + 8)     # pass 1: in x2 + f32 copy + x*x temp
    per_row2 = Df * (4 * itemsize + 8)     # pass 2: (in + out) x2 + f32 temps
    t1 = _pick_tile_rows(Nf, per_row1, cfg["pass1_budget"], cfg["row_cap"])
    t2 = _pick_tile_rows(Nf, per_row2, cfg["pass2_budget"], cfg["row_cap"])

    # pass 1: per-(folded-)feature sum / sum-of-squares
    sums, sumsqs = _compute_stats(xf, t1, cfg["num_splits"],
                                  _vmem_limit_bytes(cfg, t1 * per_row1))

    # tiny D-length finalize (un-fold partials, build scale/bias). With the
    # raised fuse threshold this path only sees large inputs, where this tiny
    # intervening XLA op is noise next to the two HBM passes.
    sum_d = sums.reshape(-1, D).sum(axis=0)
    sumsq_d = sumsqs.reshape(-1, D).sum(axis=0)
    inv_n = 1.0 / float(N)
    mean = sum_d * inv_n
    # One-pass variance E[x^2] - mean^2 (clamped). NOTE: slightly less robust
    # than the two-pass formula when |mean| >> std; accepted to keep one HBM
    # read of x for the stats pass.
    var = jnp.maximum(sumsq_d * inv_n - mean * mean, 0.0)
    rstd = jax.lax.rsqrt(var + eps)
    scale = g32.reshape(D) * rstd
    bias = b32.reshape(D) - mean * scale
    scale_f = jnp.tile(scale, fold).reshape(1, Df)
    bias_f = jnp.tile(bias, fold).reshape(1, Df)

    # pass 2: pure multiply-add stream
    out = _apply_affine(xf, scale_f, bias_f, t2,
                        _vmem_limit_bytes(cfg, t2 * per_row2))
    return out.reshape(orig_shape)


# --------------------------- reference & test ---------------------------------

def _reference(x, gamma, beta, eps=1e-5):
    shape = x.shape
    x2 = x.reshape(-1, shape[-1]).astype(jnp.float32)
    mean = jnp.mean(x2, axis=0, keepdims=True)
    var = jnp.mean((x2 - mean) ** 2, axis=0, keepdims=True)   # biased
    y = (x2 - mean) / jnp.sqrt(var + eps) * gamma.reshape(1, -1) \
        + beta.reshape(1, -1)
    return y.reshape(shape).astype(x.dtype)


if __name__ == "__main__":
    key = jax.random.PRNGKey(0)
    ks = jax.random.split(key, 12)

    # --- case 1: 3-D input, small (fused single-block path) ------------------
    dim = 32
    x3 = jax.random.normal(ks[0], (4, 8, dim), dtype=jnp.float32) * 2.0 + 0.5
    gamma = 1.0 + 0.1 * jax.random.normal(ks[1], (dim,), dtype=jnp.float32)
    beta = 0.1 * jax.random.normal(ks[2], (dim,), dtype=jnp.float32)

    y3 = jax.block_until_ready(batchnorm_forward(x3, gamma, beta))
    assert y3.shape == x3.shape
    assert jnp.allclose(y3, _reference(x3, gamma, beta), atol=1e-4, rtol=1e-4)

    # --- case 2: 2-D input (x.dim() == 2 branch of the module) ---------------
    x2d = jax.random.normal(ks[3], (16, dim), dtype=jnp.float32)
    y2d = jax.block_until_ready(batchnorm_forward(x2d, gamma, beta))
    assert jnp.allclose(y2d, _reference(x2d, gamma, beta), atol=1e-4, rtol=1e-4)

    # --- case 3: two-pass path, full lane folding + multi-tile + ragged tail
    # (and the 2-way reduction split on 2-TensorCore parts) --------------------
    dim3 = 64
    xb = jax.random.normal(ks[4], (20000, dim3), dtype=jnp.float32) + 0.25
    g3 = 1.0 + 0.1 * jax.random.normal(ks[5], (dim3,), dtype=jnp.float32)
    b3 = 0.1 * jax.random.normal(ks[6], (dim3,), dtype=jnp.float32)
    yb = jax.block_until_ready(batchnorm_forward(xb, g3, b3, fuse_bytes_limit=0))
    assert jnp.allclose(yb, _reference(xb, g3, b3), atol=1e-3, rtol=1e-3)

    # --- case 4: two-pass path, ragged N for folding (N % 4 != 0 -> fold=2) ---
    xr = jax.random.normal(ks[7], (4102, dim), dtype=jnp.float32)
    yr = jax.block_until_ready(batchnorm_forward(xr, gamma, beta,
                                                 fuse_bytes_limit=0))
    assert jnp.allclose(yr, _reference(xr, gamma, beta), atol=1e-3, rtol=1e-3)

    # --- case 5: two-pass path, feature dim not a 128 divisor (no folding) ----
    dim4 = 160
    xc = jax.random.normal(ks[8], (1031, dim4), dtype=jnp.float32) + 0.25
    g4 = 1.0 + 0.1 * jax.random.normal(ks[9], (dim4,), dtype=jnp.float32)
    b4 = 0.1 * jax.random.normal(ks[10], (dim4,), dtype=jnp.float32)
    yc = jax.block_until_ready(batchnorm_forward(xc, g4, b4, fuse_bytes_limit=0))
    assert jnp.allclose(yc, _reference(xc, g4, b4), atol=1e-3, rtol=1e-3)

    print("KERNEL_OK")
</pallas_src>

<mosaic_0001>
module attributes {stable_mosaic.version = 11 : i64} {
  func.func @_fused_kernel(%arg0: i32, %arg1: memref<32x32xf32, #tpu.memory_space<vmem>>, %arg2: memref<1x32xf32, #tpu.memory_space<vmem>>, %arg3: memref<1x32xf32, #tpu.memory_space<vmem>>, %arg4: memref<32x32xf32, #tpu.memory_space<vmem>>) attributes {dimension_semantics = [#tpu.dimension_semantics<arbitrary>], iteration_bounds = array<i64: 1>, scalar_prefetch = 0 : i64, scratch_operands = 0 : i64, tpu.core_type = #tpu.core_type<tc>, window_params = [{pipeline_mode = #tpu.pipeline_mode<synchronous>, transform_indices = @transform_0, window_bounds = array<i64: 32, 32>}, {pipeline_mode = #tpu.pipeline_mode<synchronous>, transform_indices = @transform_1, window_bounds = array<i64: 1, 32>}, {pipeline_mode = #tpu.pipeline_mode<synchronous>, transform_indices = @transform_2, window_bounds = array<i64: 1, 32>}, {pipeline_mode = #tpu.pipeline_mode<synchronous>, transform_indices = @transform_3, window_bounds = array<i64: 32, 32>}]} {
    %c0 = arith.constant 0 : index
    %c0_0 = arith.constant 0 : index
    %0 = vector.load %arg1[%c0, %c0_0] : memref<32x32xf32, #tpu.memory_space<vmem>>, vector<32x32xf32>
    %cst = arith.constant dense<0.000000e+00> : vector<32xf32>
    %1 = vector.multi_reduction <add>, %0, %cst [0] : vector<32x32xf32> to vector<32xf32>
    %2 = vector.shape_cast %1 : vector<32xf32> to vector<1x32xf32>
    %cst_1 = arith.constant 3.200000e+01 : f32
    %3 = vector.broadcast %cst_1 : f32 to vector<1x32xf32>
    %4 = arith.divf %2, %3 : vector<1x32xf32>
    %5 = vector.broadcast %4 : vector<1x32xf32> to vector<32x32xf32>
    %6 = arith.subf %0, %5 : vector<32x32xf32>
    %7 = arith.mulf %6, %6 : vector<32x32xf32>
    %cst_2 = arith.constant dense<0.000000e+00> : vector<32xf32>
    %8 = vector.multi_reduction <add>, %7, %cst_2 [0] : vector<32x32xf32> to vector<32xf32>
    %9 = vector.shape_cast %8 : vector<32xf32> to vector<1x32xf32>
    %cst_3 = arith.constant 3.200000e+01 : f32
    %10 = vector.broadcast %cst_3 : f32 to vector<1x32xf32>
    %11 = arith.divf %9, %10 : vector<1x32xf32>
    %cst_4 = arith.constant 9.99999974E-6 : f32
    %12 = vector.broadcast %cst_4 : f32 to vector<1x32xf32>
    %13 = arith.addf %11, %12 : vector<1x32xf32>
    %14 = math.rsqrt %13 : vector<1x32xf32>
    %c0_5 = arith.constant 0 : index
    %c0_6 = arith.constant 0 : index
    %15 = vector.load %arg2[%c0_5, %c0_6] : memref<1x32xf32, #tpu.memory_space<vmem>>, vector<1x32xf32>
    %16 = arith.mulf %14, %15 : vector<1x32xf32>
    %17 = vector.broadcast %16 : vector<1x32xf32> to vector<32x32xf32>
    %18 = arith.mulf %6, %17 : vector<32x32xf32>
    %c0_7 = arith.constant 0 : index
    %c0_8 = arith.constant 0 : index
    %19 = vector.load %arg3[%c0_7, %c0_8] : memref<1x32xf32, #tpu.memory_space<vmem>>, vector<1x32xf32>
    %20 = vector.broadcast %19 : vector<1x32xf32> to vector<32x32xf32>
    %21 = arith.addf %18, %20 : vector<32x32xf32>
    %c0_9 = arith.constant 0 : index
    %c0_10 = arith.constant 0 : index
    %22 = vector.load %arg4[%c0_9, %c0_10] : memref<32x32xf32, #tpu.memory_space<vmem>>, vector<32x32xf32>
    tpu.vector_store %arg4[%c0_9, %c0_10], %21 {strides = array<i32>} : memref<32x32xf32, #tpu.memory_space<vmem>>, vector<32x32xf32>,
    return
  }
  func.func @transform_0(%arg0: i32) -> (i32, i32) {
    %c0_i32 = arith.constant 0 : i32
    %c0_i32_0 = arith.constant 0 : i32
    %c0_i32_1 = arith.constant 0 : i32
    return %c0_i32, %c0_i32_0 : i32, i32
  }
  func.func @transform_1(%arg0: i32) -> (i32, i32) {
    %c0_i32 = arith.constant 0 : i32
    %c0_i32_0 = arith.constant 0 : i32
    %c0_i32_1 = arith.constant 0 : i32
    return %c0_i32, %c0_i32_0 : i32, i32
  }
  func.func @transform_2(%arg0: i32) -> (i32, i32) {
    %c0_i32 = arith.constant 0 : i32
    %c0_i32_0 = arith.constant 0 : i32
    %c0_i32_1 = arith.constant 0 : i32
    return %c0_i32, %c0_i32_0 : i32, i32
  }
  func.func @transform_3(%arg0: i32) -> (i32, i32) {
    %c0_i32 = arith.constant 0 : i32
    %c0_i32_0 = arith.constant 0 : i32
    %c0_i32_1 = arith.constant 0 : i32
    return %c0_i32, %c0_i32_0 : i32, i32
  }
}

module attributes {stable_mosaic.version = 11 : i64} {
  func.func @_fused_kernel(%arg0: i32, %arg1: memref<32x32xf32, #tpu.memory_space<vmem>>, %arg2: memref<1x32xf32, #tpu.memory_space<vmem>>, %arg3: memref<1x32xf32, #tpu.memory_space<vmem>>, %arg4: memref<32x32xf32, #tpu.memory_space<vmem>>) attributes {dimension_semantics = [#tpu.dimension_semantics<arbitrary>], iteration_bounds = array<i64: 1>, scalar_prefetch = 0 : i64, scratch_operands = 0 : i64, tpu.core_type = #tpu.core_type<tc>, window_params = [{pipeline_mode = #tpu.pipeline_mode<synchronous>, transform_indices = @transform_0, window_bounds = array<i64: 32, 32>}, {pipeline_mode = #tpu.pipeline_mode<synchronous>, transform_indices = @transform_1, window_bounds = array<i64: 1, 32>}, {pipeline_mode = #tpu.pipeline_mode<synchronous>, transform_indices = @transform_2, window_bounds = array<i64: 1, 32>}, {pipeline_mode = #tpu.pipeline_mode<synchronous>, transform_indices = @transform_3, window_bounds = array<i64: 32, 32>}]} {
    %c0 = arith.constant 0 : index
    %c0_0 = arith.constant 0 : index
    %0 = vector.load %arg1[%c0, %c0_0] : memref<32x32xf32, #tpu.memory_space<vmem>>, vector<32x32xf32>
    %cst = arith.constant dense<0.000000e+00> : vector<32xf32>
    %1 = vector.multi_reduction <add>, %0, %cst [0] : vector<32x32xf32> to vector<32xf32>
    %2 = vector.shape_cast %1 : vector<32xf32> to vector<1x32xf32>
    %cst_1 = arith.constant 3.200000e+01 : f32
    %3 = vector.broadcast %cst_1 : f32 to vector<1x32xf32>
    %4 = arith.divf %2, %3 : vector<1x32xf32>
    %5 = vector.broadcast %4 : vector<1x32xf32> to vector<32x32xf32>
    %6 = arith.subf %0, %5 : vector<32x32xf32>
    %7 = arith.mulf %6, %6 : vector<32x32xf32>
    %cst_2 = arith.constant dense<0.000000e+00> : vector<32xf32>
    %8 = vector.multi_reduction <add>, %7, %cst_2 [0] : vector<32x32xf32> to vector<32xf32>
    %9 = vector.shape_cast %8 : vector<32xf32> to vector<1x32xf32>
    %cst_3 = arith.constant 3.200000e+01 : f32
    %10 = vector.broadcast %cst_3 : f32 to vector<1x32xf32>
    %11 = arith.divf %9, %10 : vector<1x32xf32>
    %cst_4 = arith.constant 9.99999974E-6 : f32
    %12 = vector.broadcast %cst_4 : f32 to vector<1x32xf32>
    %13 = arith.addf %11, %12 : vector<1x32xf32>
    %14 = math.rsqrt %13 : vector<1x32xf32>
    %c0_5 = arith.constant 0 : index
    %c0_6 = arith.constant 0 : index
    %15 = vector.load %arg2[%c0_5, %c0_6] : memref<1x32xf32, #tpu.memory_space<vmem>>, vector<1x32xf32>
    %16 = arith.mulf %14, %15 : vector<1x32xf32>
    %17 = vector.broadcast %16 : vector<1x32xf32> to vector<32x32xf32>
    %18 = arith.mulf %6, %17 : vector<32x32xf32>
    %c0_7 = arith.constant 0 : index
    %c0_8 = arith.constant 0 : index
    %19 = vector.load %arg3[%c0_7, %c0_8] : memref<1x32xf32, #tpu.memory_space<vmem>>, vector<1x32xf32>
    %20 = vector.broadcast %19 : vector<1x32xf32> to vector<32x32xf32>
    %21 = arith.addf %18, %20 : vector<32x32xf32>
    %c0_9 = arith.constant 0 : index
    %c0_10 = arith.constant 0 : index
    %22 = vector.load %arg4[%c0_9, %c0_10] : memref<32x32xf32, #tpu.memory_space<vmem>>, vector<32x32xf32>
    tpu.vector_store %arg4[%c0_9, %c0_10], %21 {strides = array<i32>} : memref<32x32xf32, #tpu.memory_space<vmem>>, vector<32x32xf32>,
    return
  }
  func.func @transform_0(%arg0: i32) -> (i32, i32) {
    %c0_i32 = arith.constant 0 : i32
    %c0_i32_0 = arith.constant 0 : i32
    %c0_i32_1 = arith.constant 0 : i32
    return %c0_i32, %c0_i32_0 : i32, i32
  }
  func.func @transform_1(%arg0: i32) -> (i32, i32) {
    %c0_i32 = arith.constant 0 : i32
    %c0_i32_0 = arith.constant 0 : i32
    %c0_i32_1 = arith.constant 0 : i32
    return %c0_i32, %c0_i32_0 : i32, i32
  }
  func.func @transform_2(%arg0: i32) -> (i32, i32) {
    %c0_i32 = arith.constant 0 : i32
    %c0_i32_0 = arith.constant 0 : i32
    %c0_i32_1 = arith.constant 0 : i32
    return %c0_i32, %c0_i32_0 : i32, i32
  }
  func.func @transform_3(%arg0: i32) -> (i32, i32) {
    %c0_i32 = arith.constant 0 : i32
    %c0_i32_0 = arith.constant 0 : i32
    %c0_i32_1 = arith.constant 0 : i32
    return %c0_i32, %c0_i32_0 : i32, i32
  }
}

</mosaic_0001>

<llo_original>
// kernel: tpu_custom_call.1
$region0: #{tpu_custom_call.1}
  #allocation0 [shape = 'u32[]', space=smem, size = 0x4, offset = 0x4, fixed_abs, tag = 'smem constant byte address 0x4 - core index']
  #allocation1 [shape = 'u32[72,128]{1,0:T(1,128)}', space=vmem, size = 0x9000, scoped, tag = 'internal scratch']
  %s0 = inlined_call_operand.hbm [shape: f32[32,32], index: 0, kind: input, shape index: {}]
  %s1 = inlined_call_operand.hbm [shape: f32[1,32], index: 1, kind: input, shape index: {}]
  %s2 = inlined_call_operand.vmem [shape: f32[1,32], index: 2, kind: input, shape index: {}]
  %s3 = inlined_call_operand.hbm [shape: f32[32,32], index: 3, kind: output, shape index: {}]
  %s4 = sld [smem:[#allocation0]]
  $region30: #{tpu_custom_call.1} parent=0
    _
  %s6 = ssub.s32 1, %s4
  %s7 = scalar_select 0, %s6, %s4
  $region1: #{tpu_custom_call.1} parent=0
    #allocation2 [shape = 'u8[16384]{0}', space=vmem, size = 0x4000, scoped, tag = 'input window, operand 0, single buffered']
    #allocation3 [shape = 's32[1]{0}', space=sflag, size = 0x4, scoped, tag = 'scoped memory for tpu_custom_call.1']
    #allocation4 [shape = 's32[1]{0}', space=sflag, size = 0x4, scoped, tag = 'scoped memory for tpu_custom_call.1']
    #allocation5 [shape = 'u8[512]{0}', space=vmem, size = 0x400, scoped, tag = 'input window, operand 1, single buffered']
    #allocation6 [shape = 's32[1]{0}', space=sflag, size = 0x4, scoped, tag = 'scoped memory for tpu_custom_call.1']
    #allocation7 [shape = 'u8[16384]{0}', space=vmem, size = 0x4000, scoped, tag = 'output window, operand 0, single buffered']
    %8 = vsyncpa [#allocation3], 0
    %9 = vsyncpa [#allocation6], 0
    %10 = vsyncpa [#allocation4], 0
    // Predicated region
    $region2: #{tpu_custom_call.1} parent=1 // pred_check
      _
    $region3: #{tpu_custom_call.1} parent=1 // pred_check_branch
      %12 = sbr.rel (0) target = $region5
    $region4: #{tpu_custom_call.1} parent=1 // pred_region
      %14 = vsyncadd [#allocation3], 0
      %s15 = sshll.u32 %s0, 4
      %s16 = int_to_ptr.hbm [resolvable:$true] %s15
      %s17 = sshll.u32 [#allocation2], 4
      %s18 = int_to_ptr.vmem [resolvable:$true] %s17
      %23 = dma.hbm_to_vmem [thread:$0]  %s16, 512, %s18, [#allocation3], 128, 128, 8
    $region5: #{tpu_custom_call.1} parent=1 // pred_fallthru
      _
    // Predicated region
    $region6: #{tpu_custom_call.1} parent=1 // pred_check
      _
    $region7: #{tpu_custom_call.1} parent=1 // pred_check_branch
      %25 = sbr.rel (0) target = $region9
    $region8: #{tpu_custom_call.1} parent=1 // pred_region
      %27 = vsyncadd [#allocation6], 0
      %s29 = sshll.u32 %s1, 4
      %s30 = int_to_ptr.hbm [resolvable:$true] %s29
      %s31 = sshll.u32 [#allocation5], 4
      %s32 = int_to_ptr.vmem [resolvable:$true] %s31
      %34 = dma.hbm_to_vmem [thread:$0]  %s30, 16, %s32, [#allocation6]
    $region9: #{tpu_custom_call.1} parent=1 // pred_fallthru
      _
    // Predicated region
    $region10: #{tpu_custom_call.1} parent=1 // pred_check
      _
    $region11: #{tpu_custom_call.1} parent=1 // pred_check_branch
      %36 = sbr.rel (0) target = $region13
    $region12: #{tpu_custom_call.1} parent=1 // pred_region
      _
    $region13: #{tpu_custom_call.1} parent=1 // pred_fallthru
      _
    // Predicated region
    $region14: #{tpu_custom_call.1} parent=1 // pred_check
      _
    $region15: #{tpu_custom_call.1} parent=1 // pred_check_branch
      %38 = sbr.rel (0) target = $region17
    $region16: #{tpu_custom_call.1} parent=1 // pred_region
      %40 = dma.done [#allocation3], 512
    $region17: #{tpu_custom_call.1} parent=1 // pred_fallthru
      _
    // Predicated region
    $region18: #{tpu_custom_call.1} parent=1 // pred_check
      _
    $region19: #{tpu_custom_call.1} parent=1 // pred_check_branch
      %42 = sbr.rel (0) target = $region21
    $region20: #{tpu_custom_call.1} parent=1 // pred_region
      %44 = dma.done [#allocation6], 16
    $region21: #{tpu_custom_call.1} parent=1 // pred_fallthru
      _
    %v45 = vld [vmem:[#allocation2] sm:$0xff]
    %v46 = vld [vmem:[#allocation2 + $0x8] sm:$0xff]
    %v47 = vld [vmem:[#allocation2 + $0x10] sm:$0xff]
    %v48 = vld [vmem:[#allocation2 + $0x18] sm:$0xff]
    %vm49 = vcmask 261120
    %v50 = vsel %vm49, %v45, 0.0
    %v51 = vsel %vm49, %v46, 0.0
    %v52 = vadd.f32 %v50, %v51
    %v53 = vsel %vm49, %v47, 0.0
    %v54 = vadd.f32 %v52, %v53
    %v55 = vsel %vm49, %v48, 0.0
    %v56 = vadd.f32 %v54, %v55
    %v57 = vrot.slane %v56, 4
    %v58 = vadd.f32 %v56, %v57
    %v59 = vrot.slane %v58, 2
    %v60 = vadd.f32 %v58, %v59
    %v61 = vrot.slane %v60, 1
    %v62 = vadd.f32 %v60, %v61
    %v63 = vrcp.pop 32.0
    %v64 = vmul.f32 32.0, %v63
    %v65 = vsub.f32 1.0, %v64
    %v66 = vmul.f32 %v63, %v65
    %v67 = vadd.f32 %v63, %v66
    %vm68 = vweird.f32 %v63
    %v69 = vsel %vm68, %v63, %v67
    %v70 = vmul.f32 %v62, %v69
    %v71 = vsub.f32 %v45, %v70
    %v72 = vsub.f32 %v46, %v70
    %v73 = vsub.f32 %v47, %v70
    %v74 = vsub.f32 %v48, %v70
    %v75 = vmul.f32 %v71, %v71
    %v76 = vmul.f32 %v72, %v72
    %v77 = vmul.f32 %v73, %v73
    %v78 = vmul.f32 %v74, %v74
    %v79 = vsel %vm49, %v75, 0.0
    %v80 = vsel %vm49, %v76, 0.0
    %v81 = vadd.f32 %v79, %v80
    %v82 = vsel %vm49, %v77, 0.0
    %v83 = vadd.f32 %v81, %v82
    %v84 = vsel %vm49, %v78, 0.0
    %v85 = vadd.f32 %v83, %v84
    %v86 = vrot.slane %v85, 4
    %v87 = vadd.f32 %v85, %v86
    %v88 = vrot.slane %v87, 2
    %v89 = vadd.f32 %v87, %v88
    %v90 = vrot.slane %v89, 1
    %v91 = vadd.f32 %v89, %v90
    %v92 = vmul.f32 %v91, %v69
    %v93 = vadd.f32 %v92, 1e-05
    %v94 = vrsqrt.pop %v93
    %v95 = vmul.f32 %v94, %v93
    %v96 = vmul.f32 %v95, %v94
    %v97 = vmul.f32 0.5, %v96
    %v98 = vsub.f32 1.5, %v97
    %v99 = vmul.f32 %v94, %v98
    %vm100 = vweird.f32 %v93
    %vm101 = vweird.f32 %v94
    %vm102 = vmor %vm100, %vm101
    %v103 = vsel %vm102, %v94, %v99
    %v104 = vld [vmem:[#allocation5] sm:$0x1]
    %v105 = vmul.f32 %v103, %v104
    %v106 = vperm.slane %v105, 0
    %v107 = vmul.f32 %v71, %v106
    %v108 = vmul.f32 %v72, %v106
    %v109 = vmul.f32 %v73, %v106
    %v110 = vmul.f32 %v74, %v106
    %v111 = vld [vmem:[%s2] sm:$0x1]
    %v113 = vperm.slane %v111, 0
    %v115 = vadd.f32 %v107, %v113
    %v116 = vadd.f32 %v108, %v113
    %v117 = vadd.f32 %v109, %v113
    %v118 = vadd.f32 %v110, %v113
    %119 = vst.msk [vmem:[#allocation7] sm:$0xff] %vm49, %v115
    %120 = vst.msk [vmem:[#allocation7 + $0x8] sm:$0xff] %vm49, %v116
    %121 = vst.msk [vmem:[#allocation7 + $0x10] sm:$0xff] %vm49, %v117
    %122 = vst.msk [vmem:[#allocation7 + $0x18] sm:$0xff] %vm49, %v118
    // Predicated region
    $region22: #{tpu_custom_call.1} parent=1 // pred_check
      _
    $region23: #{tpu_custom_call.1} parent=1 // pred_check_branch
      %124 = sbr.rel (0) target = $region25
    $region24: #{tpu_custom_call.1} parent=1 // pred_region
      %126 = vsyncadd [#allocation4], 0
      %s127 = sshll.u32 [#allocation7], 4
      %s128 = int_to_ptr.vmem [resolvable:$true] %s127
      %s129 = sshll.u32 %s3, 4
      %s130 = int_to_ptr.hbm [resolvable:$true] %s129
      %135 = dma.vmem_to_hbm [thread:$0]  %s128, 512, %s130, [#allocation4], 128, 128, 8
    $region25: #{tpu_custom_call.1} parent=1 // pred_fallthru
      _
    // Predicated region
    $region26: #{tpu_custom_call.1} parent=1 // pred_check
      _
    $region27: #{tpu_custom_call.1} parent=1 // pred_check_branch
      %137 = sbr.rel (0) target = $region29
    $region28: #{tpu_custom_call.1} parent=1 // pred_region
      %139 = dma.done [#allocation4], 512
    $region29: #{tpu_custom_call.1} parent=1 // pred_fallthru
      _
    %140 = vsyncpa [#allocation3], 1
    %141 = vsyncpa [#allocation6], 1
    %142 = vsyncpa [#allocation4], 1

// kernel: tpu_custom_call.1
$region0: #{tpu_custom_call.1}
  #allocation0 [shape = 'u32[]', space=smem, size = 0x4, offset = 0x4, fixed_abs, tag = 'smem constant byte address 0x4 - core index']
  #allocation1 [shape = 'u32[72,128]{1,0:T(1,128)}', space=vmem, size = 0x9000, scoped, tag = 'internal scratch']
  %s0 = inlined_call_operand.hbm [shape: f32[32,32], index: 0, kind: input, shape index: {}]
  %s1 = inlined_call_operand.hbm [shape: f32[1,32], index: 1, kind: input, shape index: {}]
  %s2 = inlined_call_operand.vmem [shape: f32[1,32], index: 2, kind: input, shape index: {}]
  %s3 = inlined_call_operand.hbm [shape: f32[32,32], index: 3, kind: output, shape index: {}]
  %s4 = sld [smem:[#allocation0]]
  $region30: #{tpu_custom_call.1} parent=0
    _
  %s6 = ssub.s32 1, %s4
  %s7 = scalar_select 0, %s6, %s4
  $region1: #{tpu_custom_call.1} parent=0
    #allocation2 [shape = 'u8[16384]{0}', space=vmem, size = 0x4000, scoped, tag = 'input window, operand 0, single buffered']
    #allocation3 [shape = 's32[1]{0}', space=sflag, size = 0x4, scoped, tag = 'scoped memory for tpu_custom_call.1']
    #allocation4 [shape = 's32[1]{0}', space=sflag, size = 0x4, scoped, tag = 'scoped memory for tpu_custom_call.1']
    #allocation5 [shape = 'u8[512]{0}', space=vmem, size = 0x400, scoped, tag = 'input window, operand 1, single buffered']
    #allocation6 [shape = 's32[1]{0}', space=sflag, size = 0x4, scoped, tag = 'scoped memory for tpu_custom_call.1']
    #allocation7 [shape = 'u8[16384]{0}', space=vmem, size = 0x4000, scoped, tag = 'output window, operand 0, single buffered']
    %8 = vsyncpa [#allocation3], 0
    %9 = vsyncpa [#allocation6], 0
    %10 = vsyncpa [#allocation4], 0
    // Predicated region
    $region2: #{tpu_custom_call.1} parent=1 // pred_check
      _
    $region3: #{tpu_custom_call.1} parent=1 // pred_check_branch
      %12 = sbr.rel (0) target = $region5
    $region4: #{tpu_custom_call.1} parent=1 // pred_region
      %14 = vsyncadd [#allocation3], 0
      %s15 = sshll.u32 %s0, 4
      %s16 = int_to_ptr.hbm [resolvable:$true] %s15
      %s17 = sshll.u32 [#allocation2], 4
      %s18 = int_to_ptr.vmem [resolvable:$true] %s17
      %23 = dma.hbm_to_vmem [thread:$0]  %s16, 512, %s18, [#allocation3], 128, 128, 8
    $region5: #{tpu_custom_call.1} parent=1 // pred_fallthru
      _
    // Predicated region
    $region6: #{tpu_custom_call.1} parent=1 // pred_check
      _
    $region7: #{tpu_custom_call.1} parent=1 // pred_check_branch
      %25 = sbr.rel (0) target = $region9
    $region8: #{tpu_custom_call.1} parent=1 // pred_region
      %27 = vsyncadd [#allocation6], 0
      %s29 = sshll.u32 %s1, 4
      %s30 = int_to_ptr.hbm [resolvable:$true] %s29
      %s31 = sshll.u32 [#allocation5], 4
      %s32 = int_to_ptr.vmem [resolvable:$true] %s31
      %34 = dma.hbm_to_vmem [thread:$0]  %s30, 16, %s32, [#allocation6]
    $region9: #{tpu_custom_call.1} parent=1 // pred_fallthru
      _
    // Predicated region
    $region10: #{tpu_custom_call.1} parent=1 // pred_check
      _
    $region11: #{tpu_custom_call.1} parent=1 // pred_check_branch
      %36 = sbr.rel (0) target = $region13
    $region12: #{tpu_custom_call.1} parent=1 // pred_region
      _
    $region13: #{tpu_custom_call.1} parent=1 // pred_fallthru
      _
    // Predicated region
    $region14: #{tpu_custom_call.1} parent=1 // pred_check
      _
    $region15: #{tpu_custom_call.1} parent=1 // pred_check_branch
      %38 = sbr.rel (0) target = $region17
    $region16: #{tpu_custom_call.1} parent=1 // pred_region
      %40 = dma.done [#allocation3], 512
    $region17: #{tpu_custom_call.1} parent=1 // pred_fallthru
      _
    // Predicated region
    $region18: #{tpu_custom_call.1} parent=1 // pred_check
      _
    $region19: #{tpu_custom_call.1} parent=1 // pred_check_branch
      %42 = sbr.rel (0) target = $region21
    $region20: #{tpu_custom_call.1} parent=1 // pred_region
      %44 = dma.done [#allocation6], 16
    $region21: #{tpu_custom_call.1} parent=1 // pred_fallthru
      _
    %v45 = vld [vmem:[#allocation2] sm:$0xff]
    %v46 = vld [vmem:[#allocation2 + $0x8] sm:$0xff]
    %v47 = vld [vmem:[#allocation2 + $0x10] sm:$0xff]
    %v48 = vld [vmem:[#allocation2 + $0x18] sm:$0xff]
    %vm49 = vcmask 261120
    %v50 = vsel %vm49, %v45, 0.0
    %v51 = vsel %vm49, %v46, 0.0
    %v52 = vadd.f32 %v50, %v51
    %v53 = vsel %vm49, %v47, 0.0
    %v54 = vadd.f32 %v52, %v53
    %v55 = vsel %vm49, %v48, 0.0
    %v56 = vadd.f32 %v54, %v55
    %v57 = vrot.slane %v56, 4
    %v58 = vadd.f32 %v56, %v57
    %v59 = vrot.slane %v58, 2
    %v60 = vadd.f32 %v58, %v59
    %v61 = vrot.slane %v60, 1
    %v62 = vadd.f32 %v60, %v61
    %v63 = vrcp.pop 32.0
    %v64 = vmul.f32 32.0, %v63
    %v65 = vsub.f32 1.0, %v64
    %v66 = vmul.f32 %v63, %v65
    %v67 = vadd.f32 %v63, %v66
    %vm68 = vweird.f32 %v63
    %v69 = vsel %vm68, %v63, %v67
    %v70 = vmul.f32 %v62, %v69
    %v71 = vsub.f32 %v45, %v70
    %v72 = vsub.f32 %v46, %v70
    %v73 = vsub.f32 %v47, %v70
    %v74 = vsub.f32 %v48, %v70
    %v75 = vmul.f32 %v71, %v71
    %v76 = vmul.f32 %v72, %v72
    %v77 = vmul.f32 %v73, %v73
    %v78 = vmul.f32 %v74, %v74
    %v79 = vsel %vm49, %v75, 0.0
    %v80 = vsel %vm49, %v76, 0.0
    %v81 = vadd.f32 %v79, %v80
    %v82 = vsel %vm49, %v77, 0.0
    %v83 = vadd.f32 %v81, %v82
    %v84 = vsel %vm49, %v78, 0.0
    %v85 = vadd.f32 %v83, %v84
    %v86 = vrot.slane %v85, 4
    %v87 = vadd.f32 %v85, %v86
    %v88 = vrot.slane %v87, 2
    %v89 = vadd.f32 %v87, %v88
    %v90 = vrot.slane %v89, 1
    %v91 = vadd.f32 %v89, %v90
    %v92 = vmul.f32 %v91, %v69
    %v93 = vadd.f32 %v92, 1e-05
    %v94 = vrsqrt.pop %v93
    %v95 = vmul.f32 %v94, %v93
    %v96 = vmul.f32 %v95, %v94
    %v97 = vmul.f32 0.5, %v96
    %v98 = vsub.f32 1.5, %v97
    %v99 = vmul.f32 %v94, %v98
    %vm100 = vweird.f32 %v93
    %vm101 = vweird.f32 %v94
    %vm102 = vmor %vm100, %vm101
    %v103 = vsel %vm102, %v94, %v99
    %v104 = vld [vmem:[#allocation5] sm:$0x1]
    %v105 = vmul.f32 %v103, %v104
    %v106 = vperm.slane %v105, 0
    %v107 = vmul.f32 %v71, %v106
    %v108 = vmul.f32 %v72, %v106
    %v109 = vmul.f32 %v73, %v106
    %v110 = vmul.f32 %v74, %v106
    %v111 = vld [vmem:[%s2] sm:$0x1]
    %v113 = vperm.slane %v111, 0
    %v115 = vadd.f32 %v107, %v113
    %v116 = vadd.f32 %v108, %v113
    %v117 = vadd.f32 %v109, %v113
    %v118 = vadd.f32 %v110, %v113
    %119 = vst.msk [vmem:[#allocation7] sm:$0xff] %vm49, %v115
    %120 = vst.msk [vmem:[#allocation7 + $0x8] sm:$0xff] %vm49, %v116
    %121 = vst.msk [vmem:[#allocation7 + $0x10] sm:$0xff] %vm49, %v117
    %122 = vst.msk [vmem:[#allocation7 + $0x18] sm:$0xff] %vm49, %v118
    // Predicated region
    $region22: #{tpu_custom_call.1} parent=1 // pred_check
      _
    $region23: #{tpu_custom_call.1} parent=1 // pred_check_branch
      %124 = sbr.rel (0) target = $region25
    $region24: #{tpu_custom_call.1} parent=1 // pred_region
      %126 = vsyncadd [#allocation4], 0
      %s127 = sshll.u32 [#allocation7], 4
      %s128 = int_to_ptr.vmem [resolvable:$true] %s127
      %s129 = sshll.u32 %s3, 4
      %s130 = int_to_ptr.hbm [resolvable:$true] %s129
      %135 = dma.vmem_to_hbm [thread:$0]  %s128, 512, %s130, [#allocation4], 128, 128, 8
    $region25: #{tpu_custom_call.1} parent=1 // pred_fallthru
      _
    // Predicated region
    $region26: #{tpu_custom_call.1} parent=1 // pred_check
      _
    $region27: #{tpu_custom_call.1} parent=1 // pred_check_branch
      %137 = sbr.rel (0) target = $region29
    $region28: #{tpu_custom_call.1} parent=1 // pred_region
      %139 = dma.done [#allocation4], 512
    $region29: #{tpu_custom_call.1} parent=1 // pred_fallthru
      _
    %140 = vsyncpa [#allocation3], 1
    %141 = vsyncpa [#allocation6], 1
    %142 = vsyncpa [#allocation4], 1

</llo_original>
